<compile_context>
chip_gen: v7x
topology: tpu7x:2x2x1
jax: 0.10.0
libtpu: 0.0.40
codegen_flags: <defaults>
</compile_context>

<pallas_src>
import functools

import jax
import jax.numpy as jnp
from jax.experimental import pallas as pl
from jax.experimental.pallas import tpu as pltpu


def _lora_predictor_kernel(x_ref, wu_ref, wv_ref, bu_ref, bv_ref, u_ref, v_ref):
    # Hot path: two MXU matmuls with f32 accumulation; bias add + tanh on
    # VPU/EUP in f32; cast to the output dtype at the very end.
    x = x_ref[...]
    u_acc = jnp.dot(x, wu_ref[...], preferred_element_type=jnp.float32)
    v_acc = jnp.dot(x, wv_ref[...], preferred_element_type=jnp.float32)
    u_ref[...] = jnp.tanh(u_acc + bu_ref[...].astype(jnp.float32)).astype(u_ref.dtype)
    v_ref[...] = jnp.tanh(v_acc + bv_ref[...].astype(jnp.float32)).astype(v_ref.dtype)


def _round_up(x, m):
    return ((x + m - 1) // m) * m


@functools.partial(jax.jit, static_argnames=("u_shape", "v_shape", "block_b"))
def lora_predictor_forward(x, weight, bias, *, u_shape, v_shape, block_b=256):
    """x: (B, message_size); weight: (message_size, O); bias: (O,) or (1, O)."""
    B, M = x.shape
    O = weight.shape[1]
    UE = u_shape[0] * u_shape[1]
    VE = v_shape[0] * v_shape[1]
    assert O == UE + VE

    bias = bias.reshape(1, O)

    # Batch tile: multiple of the sublane granularity for this dtype
    # (8 rows for 4-byte dtypes, 16 for bf16, ...). Pad B up to a tile multiple.
    sub = 8 * (4 // x.dtype.itemsize)
    tm = _round_up(min(block_b, _round_up(B, sub)), sub)
    B_pad = _round_up(B, tm)
    if B_pad != B:
        x = jnp.pad(x, ((0, B_pad - B), (0, 0)))

    # Column-split weight/bias once in the wrapper so the kernel emits two
    # lane-dense outputs directly (no post-kernel slice of the activations).
    wu, wv = weight[:, :UE], weight[:, UE:]
    bu, bv = bias[:, :UE], bias[:, UE:]

    grid = (B_pad // tm,)
    out_dtype = x.dtype
    itm = x.dtype.itemsize

    cost = pl.CostEstimate(
        flops=2 * B_pad * M * O,
        transcendentals=B_pad * O,
        bytes_accessed=(
            B_pad * M * itm                     # x
            + M * O * weight.dtype.itemsize     # weight (resident, read once)
            + O * bias.dtype.itemsize           # bias
            + B_pad * O * itm                   # u_flat + v_flat
        ),
    )

    u_flat, v_flat = pl.pallas_call(
        _lora_predictor_kernel,
        out_shape=(
            jax.ShapeDtypeStruct((B_pad, UE), out_dtype),
            jax.ShapeDtypeStruct((B_pad, VE), out_dtype),
        ),
        grid_spec=pltpu.PrefetchScalarGridSpec(
            num_scalar_prefetch=0,
            grid=grid,
            in_specs=[
                # x: batch-tiled.
                pl.BlockSpec((tm, M), lambda i: (i, 0)),
                # weight / bias: constant index_map -> stay VMEM-resident
                # across all batch tiles.
                pl.BlockSpec((M, UE), lambda i: (0, 0)),
                pl.BlockSpec((M, VE), lambda i: (0, 0)),
                pl.BlockSpec((1, UE), lambda i: (0, 0)),
                pl.BlockSpec((1, VE), lambda i: (0, 0)),
            ],
            out_specs=[
                pl.BlockSpec((tm, UE), lambda i: (i, 0)),
                pl.BlockSpec((tm, VE), lambda i: (i, 0)),
            ],
        ),
        compiler_params=pltpu.CompilerParams(
            # Batch tiles are independent -> shard across TensorCores on v7x.
            dimension_semantics=("parallel",),
        ),
        cost_estimate=cost,
    )(x, wu, wv, bu, bv)

    # Glue: strip batch padding + reshape (no compute), matching torch semantics.
    u = u_flat[:B].reshape(-1, *u_shape)
    v = v_flat[:B].reshape(-1, *v_shape)
    return u, v


def init_params(key, message_size, output_size, dtype=jnp.float32):
    """Deterministic init mimicking nn.Linear default: U(-1/sqrt(in), 1/sqrt(in))."""
    k_w, k_b = jax.random.split(key)
    bound = 1.0 / (message_size ** 0.5)
    # Stored as (in, out) so the kernel does x @ W (== x @ W_torch.T).
    weight = jax.random.uniform(
        k_w, (message_size, output_size), dtype, minval=-bound, maxval=bound
    )
    bias = jax.random.uniform(
        k_b, (1, output_size), dtype, minval=-bound, maxval=bound
    )
    return weight, bias


if __name__ == "__main__":
    # Small shapes consistent with the module's forward.
    batch = 2
    message_size = 32
    u_shape = (8, 16)   # u0 * u1 = 128
    v_shape = (16, 8)   # v0 * v1 = 128
    output_size = u_shape[0] * u_shape[1] + v_shape[0] * v_shape[1]  # 256

    key = jax.random.PRNGKey(0)
    k_x, k_p = jax.random.split(key)
    x = jax.random.normal(k_x, (batch, message_size), jnp.float32)
    weight, bias = init_params(k_p, message_size, output_size)

    # f32 path.
    u, v = lora_predictor_forward(x, weight, bias, u_shape=u_shape, v_shape=v_shape)
    jax.block_until_ready((u, v))

    # Correctness check against plain-JAX reference of the PyTorch forward.
    ref = jnp.tanh(x @ weight + bias)
    u_elems = u_shape[0] * u_shape[1]
    ref_u = ref[:, :u_elems].reshape(-1, *u_shape)
    ref_v = ref[:, u_elems:].reshape(-1, *v_shape)
    assert u.shape == (batch, *u_shape) and v.shape == (batch, *v_shape)
    assert jnp.allclose(u, ref_u, atol=1e-4), "f32 u mismatch"
    assert jnp.allclose(v, ref_v, atol=1e-4), "f32 v mismatch"

    # bf16-operand path (halved weight HBM/VMEM traffic; f32 MXU accumulate).
    u_bf, v_bf = lora_predictor_forward(
        x.astype(jnp.bfloat16),
        weight.astype(jnp.bfloat16),
        bias.astype(jnp.bfloat16),
        u_shape=u_shape,
        v_shape=v_shape,
    )
    jax.block_until_ready((u_bf, v_bf))
    assert u_bf.shape == (batch, *u_shape) and v_bf.shape == (batch, *v_shape)
    assert jnp.allclose(u_bf.astype(jnp.float32), ref_u, atol=3e-2), "bf16 u mismatch"
    assert jnp.allclose(v_bf.astype(jnp.float32), ref_v, atol=3e-2), "bf16 v mismatch"

    print("KERNEL_OK")
</pallas_src>

<mosaic_0001>
module attributes {stable_mosaic.version = 11 : i64} {
  func.func @_lora_predictor_kernel(%arg0: i32, %arg1: memref<8x32xf32, #tpu.memory_space<vmem>>, %arg2: memref<32x128xf32, #tpu.memory_space<vmem>>, %arg3: memref<32x128xf32, #tpu.memory_space<vmem>>, %arg4: memref<1x128xf32, #tpu.memory_space<vmem>>, %arg5: memref<1x128xf32, #tpu.memory_space<vmem>>, %arg6: memref<8x128xf32, #tpu.memory_space<vmem>>, %arg7: memref<8x128xf32, #tpu.memory_space<vmem>>) attributes {dimension_semantics = [#tpu.dimension_semantics<parallel>], iteration_bounds = array<i64: 1>, scalar_prefetch = 0 : i64, scratch_operands = 0 : i64, tpu.core_type = #tpu.core_type<tc>, window_params = [{transform_indices = @transform_0, window_bounds = array<i64: 8, 32>}, {pipeline_mode = #tpu.pipeline_mode<synchronous>, transform_indices = @transform_1, window_bounds = array<i64: 32, 128>}, {pipeline_mode = #tpu.pipeline_mode<synchronous>, transform_indices = @transform_2, window_bounds = array<i64: 32, 128>}, {pipeline_mode = #tpu.pipeline_mode<synchronous>, transform_indices = @transform_3, window_bounds = array<i64: 1, 128>}, {pipeline_mode = #tpu.pipeline_mode<synchronous>, transform_indices = @transform_4, window_bounds = array<i64: 1, 128>}, {transform_indices = @transform_5, window_bounds = array<i64: 8, 128>}, {transform_indices = @transform_6, window_bounds = array<i64: 8, 128>}]} {
    %c0 = arith.constant 0 : index
    %c0_0 = arith.constant 0 : index
    %0 = vector.load %arg1[%c0, %c0_0] : memref<8x32xf32, #tpu.memory_space<vmem>>, vector<8x32xf32>
    %c0_1 = arith.constant 0 : index
    %c0_2 = arith.constant 0 : index
    %1 = vector.load %arg2[%c0_1, %c0_2] : memref<32x128xf32, #tpu.memory_space<vmem>>, vector<32x128xf32>
    %cst = arith.constant dense<0.000000e+00> : vector<8x128xf32>
    %2 = tpu.matmul %0, %1, %cst {dimension_numbers = #tpu.dot_dimension_numbers<[1], [0], [0], [1], [0, 0, 1, 1], [], []>} : vector<8x32xf32>, vector<32x128xf32>, vector<8x128xf32> -> vector<8x128xf32>
    %c0_3 = arith.constant 0 : index
    %c0_4 = arith.constant 0 : index
    %3 = vector.load %arg3[%c0_3, %c0_4] : memref<32x128xf32, #tpu.memory_space<vmem>>, vector<32x128xf32>
    %cst_5 = arith.constant dense<0.000000e+00> : vector<8x128xf32>
    %4 = tpu.matmul %0, %3, %cst_5 {dimension_numbers = #tpu.dot_dimension_numbers<[1], [0], [0], [1], [0, 0, 1, 1], [], []>} : vector<8x32xf32>, vector<32x128xf32>, vector<8x128xf32> -> vector<8x128xf32>
    %c0_6 = arith.constant 0 : index
    %c0_7 = arith.constant 0 : index
    %5 = vector.load %arg4[%c0_6, %c0_7] : memref<1x128xf32, #tpu.memory_space<vmem>>, vector<1x128xf32>
    %6 = vector.broadcast %5 : vector<1x128xf32> to vector<8x128xf32>
    %7 = arith.addf %2, %6 : vector<8x128xf32>
    %8 = math.tanh %7 : vector<8x128xf32>
    %c0_8 = arith.constant 0 : index
    %c0_9 = arith.constant 0 : index
    %9 = vector.load %arg6[%c0_8, %c0_9] : memref<8x128xf32, #tpu.memory_space<vmem>>, vector<8x128xf32>
    tpu.vector_store %arg6[%c0_8, %c0_9], %8 {strides = array<i32>} : memref<8x128xf32, #tpu.memory_space<vmem>>, vector<8x128xf32>,
    %c0_10 = arith.constant 0 : index
    %c0_11 = arith.constant 0 : index
    %10 = vector.load %arg5[%c0_10, %c0_11] : memref<1x128xf32, #tpu.memory_space<vmem>>, vector<1x128xf32>
    %11 = vector.broadcast %10 : vector<1x128xf32> to vector<8x128xf32>
    %12 = arith.addf %4, %11 : vector<8x128xf32>
    %13 = math.tanh %12 : vector<8x128xf32>
    %c0_12 = arith.constant 0 : index
    %c0_13 = arith.constant 0 : index
    %14 = vector.load %arg7[%c0_12, %c0_13] : memref<8x128xf32, #tpu.memory_space<vmem>>, vector<8x128xf32>
    tpu.vector_store %arg7[%c0_12, %c0_13], %13 {strides = array<i32>} : memref<8x128xf32, #tpu.memory_space<vmem>>, vector<8x128xf32>,
    return
  }
  func.func @transform_0(%arg0: i32) -> (i32, i32) {
    %c0_i32 = arith.constant 0 : i32
    %c0_i32_0 = arith.constant 0 : i32
    return %arg0, %c0_i32 : i32, i32
  }
  func.func @transform_1(%arg0: i32) -> (i32, i32) {
    %c0_i32 = arith.constant 0 : i32
    %c0_i32_0 = arith.constant 0 : i32
    %c0_i32_1 = arith.constant 0 : i32
    return %c0_i32, %c0_i32_0 : i32, i32
  }
  func.func @transform_2(%arg0: i32) -> (i32, i32) {
    %c0_i32 = arith.constant 0 : i32
    %c0_i32_0 = arith.constant 0 : i32
    %c0_i32_1 = arith.constant 0 : i32
    return %c0_i32, %c0_i32_0 : i32, i32
  }
  func.func @transform_3(%arg0: i32) -> (i32, i32) {
    %c0_i32 = arith.constant 0 : i32
    %c0_i32_0 = arith.constant 0 : i32
    %c0_i32_1 = arith.constant 0 : i32
    return %c0_i32, %c0_i32_0 : i32, i32
  }
  func.func @transform_4(%arg0: i32) -> (i32, i32) {
    %c0_i32 = arith.constant 0 : i32
    %c0_i32_0 = arith.constant 0 : i32
    %c0_i32_1 = arith.constant 0 : i32
    return %c0_i32, %c0_i32_0 : i32, i32
  }
  func.func @transform_5(%arg0: i32) -> (i32, i32) {
    %c0_i32 = arith.constant 0 : i32
    %c0_i32_0 = arith.constant 0 : i32
    return %arg0, %c0_i32 : i32, i32
  }
  func.func @transform_6(%arg0: i32) -> (i32, i32) {
    %c0_i32 = arith.constant 0 : i32
    %c0_i32_0 = arith.constant 0 : i32
    return %arg0, %c0_i32 : i32, i32
  }
}

</mosaic_0001>

<llo_original>
// kernel: lora_predictor_forward.1
$region0: #{lora_predictor_forward.1}
  #allocation0 [shape = 'u32[]', space=smem, size = 0x4, offset = 0x4, fixed_abs, tag = 'smem constant byte address 0x4 - core index']
  #allocation1 [shape = 'u32[144,128]{1,0:T(1,128)}', space=vmem, size = 0x12000, scoped, tag = 'internal scratch']
  %s0 = inlined_call_operand.vmem [shape: f32[8,32], index: 0, kind: input, shape index: {}]
  %s1 = inlined_call_operand.vmem [shape: f32[32,128], index: 1, kind: input, shape index: {}]
  %s2 = inlined_call_operand.vmem [shape: f32[32,128], index: 2, kind: input, shape index: {}]
  %s3 = inlined_call_operand.vmem [shape: f32[1,128], index: 3, kind: input, shape index: {}]
  %s4 = inlined_call_operand.vmem [shape: f32[1,128], index: 4, kind: input, shape index: {}]
  %s5 = inlined_call_operand.vmem [shape: f32[8,128], index: 5, kind: output, shape index: {0}]
  %s6 = inlined_call_operand.vmem [shape: f32[8,128], index: 6, kind: output, shape index: {1}]
  %7 = xla_tuple %s5, %s6
  %s8 = sld [smem:[#allocation0]]
  $region38: #{lora_predictor_forward.1} parent=0
    _
  %s10 = ssub.s32 1, %s8
  %s11 = scalar_select 0, %s10, %s8
  // Predicated region
  $region2: #{lora_predictor_forward.1} parent=0 // pred_check
    _
  $region3: #{lora_predictor_forward.1} parent=0 // pred_check_branch
    %13 = sbr.rel (0) target = $region5
  $region4: #{lora_predictor_forward.1} parent=0 // pred_region
    _
  $region5: #{lora_predictor_forward.1} parent=0 // pred_fallthru
    _
  // Predicated region
  $region6: #{lora_predictor_forward.1} parent=0 // pred_check
    _
  $region7: #{lora_predictor_forward.1} parent=0 // pred_check_branch
    %15 = sbr.rel (0) target = $region9
  $region8: #{lora_predictor_forward.1} parent=0 // pred_region
    _
  $region9: #{lora_predictor_forward.1} parent=0 // pred_fallthru
    _
  // Predicated region
  $region10: #{lora_predictor_forward.1} parent=0 // pred_check
    _
  $region11: #{lora_predictor_forward.1} parent=0 // pred_check_branch
    %17 = sbr.rel (0) target = $region13
  $region12: #{lora_predictor_forward.1} parent=0 // pred_region
    _
  $region13: #{lora_predictor_forward.1} parent=0 // pred_fallthru
    _
  // Predicated region
  $region14: #{lora_predictor_forward.1} parent=0 // pred_check
    _
  $region15: #{lora_predictor_forward.1} parent=0 // pred_check_branch
    %19 = sbr.rel (0) target = $region17
  $region16: #{lora_predictor_forward.1} parent=0 // pred_region
    _
  $region17: #{lora_predictor_forward.1} parent=0 // pred_fallthru
    _
  // Predicated region
  $region18: #{lora_predictor_forward.1} parent=0 // pred_check
    _
  $region19: #{lora_predictor_forward.1} parent=0 // pred_check_branch
    %21 = sbr.rel (0) target = $region21
  $region20: #{lora_predictor_forward.1} parent=0 // pred_region
    _
  $region21: #{lora_predictor_forward.1} parent=0 // pred_fallthru
    _
  %v22 = vld [vmem:[%s0] sm:$0xff]
  %v23 = vld [vmem:[%s1] sm:$0xff]
  %v24 = vld [vmem:[%s1 + $0x8] sm:$0xff]
  %v25 = vld [vmem:[%s1 + $0x10] sm:$0xff]
  %v26 = vld [vmem:[%s1 + $0x18] sm:$0xff]
  %v27 = vld [vmem:[%s2] sm:$0xff]
  %v28 = vld [vmem:[%s2 + $0x8] sm:$0xff]
  %v29 = vld [vmem:[%s2 + $0x10] sm:$0xff]
  %v30 = vld [vmem:[%s2 + $0x18] sm:$0xff]
  %v31 = vld [vmem:[%s3] sm:$0x1]
  %v33 = vlaneseq
  %v34 = vshrl.u32 %v33, 7
  %v35 = vsub.s32 0, %v34
  %v36 = vrot.slane %v31, %v35
  %vm38 = vcmask 261120
  %v40 = vsel %vm38, %v22, 0
  %42 = vmatprep.subr.mxu0 0.0
  %43 = vmatpush1.msra.mxu0 %v23
  %44 = vmatprep.subr.mxu0 0.0
  %45 = vmatpush1.msra.mxu0 %v24
  %46 = vmatprep.subr.mxu0 0.0
  %47 = vmatpush1.msra.mxu0 %v25
  %48 = vmatprep.subr.mxu0 0.0
  %49 = vmatpush1.msra.mxu0 %v26
  %50 = vmatprep.subr.mxu0 0.0
  %51 = vmatpush1.msra.mxu0 0.0
  %52 = vmatprep.subr.mxu0 0.0
  %53 = vmatpush1.msra.mxu0 0.0
  %54 = vmatprep.subr.mxu0 0.0
  %55 = vmatpush1.msra.mxu0 0.0
  %56 = vmatprep.subr.mxu0 0.0
  %57 = vmatpush1.msra.mxu0 0.0
  %58 = vmatprep.subr.mxu0 0.0
  %59 = vmatpush1.msra.mxu0 0.0
  %60 = vmatprep.subr.mxu0 0.0
  %61 = vmatpush1.msra.mxu0 0.0
  %62 = vmatprep.subr.mxu0 0.0
  %63 = vmatpush1.msra.mxu0 0.0
  %64 = vmatprep.subr.mxu0 0.0
  %65 = vmatpush1.msra.mxu0 0.0
  %66 = vmatprep.subr.mxu0 0.0
  %67 = vmatpush1.msra.mxu0 0.0
  %68 = vmatprep.subr.mxu0 0.0
  %69 = vmatpush1.msra.mxu0 0.0
  %70 = vmatprep.subr.mxu0 0.0
  %71 = vmatpush1.msra.mxu0 0.0
  %72 = vmatprep.subr.mxu0 0.0
  %73 = vmatpush1.msra.mxu0 0.0
  %74 = vmatprep.subr.mxu0 0.0
  %75 = vmatpush1.msra.mxu0 0.0
  %76 = vmatprep.subr.mxu0 0.0
  %77 = vmatpush1.msra.mxu0 0.0
  %78 = vmatprep.subr.mxu0 0.0
  %79 = vmatpush1.msra.mxu0 0.0
  %80 = vmatprep.subr.mxu0 0.0
  %81 = vmatpush1.msra.mxu0 0.0
  %82 = vmatprep.subr.mxu0 0.0
  %83 = vmatpush1.msra.mxu0 0.0
  %84 = vmatprep.subr.mxu0 0.0
  %85 = vmatpush1.msra.mxu0 0.0
  %86 = vmatprep.subr.mxu0 0.0
  %87 = vmatpush1.msra.mxu0 0.0
  %88 = vmatprep.subr.mxu0 0.0
  %89 = vmatpush1.msra.mxu0 0.0
  %90 = vmatprep.subr.mxu0 0.0
  %91 = vmatpush1.msra.mxu0 0.0
  %92 = vmatprep.subr.mxu0 0.0
  %93 = vmatpush1.msra.mxu0 0.0
  %94 = vmatprep.subr.mxu0 0.0
  %95 = vmatpush1.msra.mxu0 0.0
  %96 = vmatprep.subr.mxu0 0.0
  %97 = vmatpush1.msra.mxu0 0.0
  %98 = vmatprep.subr.mxu0 0.0
  %99 = vmatpush1.msra.mxu0 0.0
  %100 = vmatprep.subr.mxu0 0.0
  %101 = vmatpush1.msra.mxu0 0.0
  %102 = vmatprep.subr.mxu0 0.0
  %103 = vmatpush1.msra.mxu0 0.0
  %104 = vmatprep.subr.mxu0 0.0
  %105 = vmatpush1.msra.mxu0 0.0
  %106 = vmatprep.mubr.f32.mxu0 0.0
  %107 = vmatmul.mubr.f32.gmra.mrb[0].mxu0 %v40
  %v108 = vpop.f32.mrb[0].mxu0
  %v109 = vadd.f32 %v36, %v108
  %v110 = vpop.f32.mrb[0].mxu0
  %111 = vdwg.mxu0
  %v112 = vtanh.pop %v109
  %113 = vst [vmem:[%s5] sm:$0xff] %v112
  %v114 = vld [vmem:[%s4] sm:$0x1]
  %v116 = vlaneseq
  %v117 = vshrl.u32 %v116, 7
  %v118 = vsub.s32 0, %v117
  %v119 = vrot.slane %v114, %v118
  %121 = vmatprep.subr.mxu0 0.0
  %122 = vmatpush1.msra.mxu0 %v27
  %123 = vmatprep.subr.mxu0 0.0
  %124 = vmatpush1.msra.mxu0 %v28
  %125 = vmatprep.subr.mxu0 0.0
  %126 = vmatpush1.msra.mxu0 %v29
  %127 = vmatprep.subr.mxu0 0.0
  %128 = vmatpush1.msra.mxu0 %v30
  %129 = vmatprep.subr.mxu0 0.0
  %130 = vmatpush1.msra.mxu0 0.0
  %131 = vmatprep.subr.mxu0 0.0
  %132 = vmatpush1.msra.mxu0 0.0
  %133 = vmatprep.subr.mxu0 0.0
  %134 = vmatpush1.msra.mxu0 0.0
  %135 = vmatprep.subr.mxu0 0.0
  %136 = vmatpush1.msra.mxu0 0.0
  %137 = vmatprep.subr.mxu0 0.0
  %138 = vmatpush1.msra.mxu0 0.0
  %139 = vmatprep.subr.mxu0 0.0
  %140 = vmatpush1.msra.mxu0 0.0
  %141 = vmatprep.subr.mxu0 0.0
  %142 = vmatpush1.msra.mxu0 0.0
  %143 = vmatprep.subr.mxu0 0.0
  %144 = vmatpush1.msra.mxu0 0.0
  %145 = vmatprep.subr.mxu0 0.0
  %146 = vmatpush1.msra.mxu0 0.0
  %147 = vmatprep.subr.mxu0 0.0
  %148 = vmatpush1.msra.mxu0 0.0
  %149 = vmatprep.subr.mxu0 0.0
  %150 = vmatpush1.msra.mxu0 0.0
  %151 = vmatprep.subr.mxu0 0.0
  %152 = vmatpush1.msra.mxu0 0.0
  %153 = vmatprep.subr.mxu0 0.0
  %154 = vmatpush1.msra.mxu0 0.0
  %155 = vmatprep.subr.mxu0 0.0
  %156 = vmatpush1.msra.mxu0 0.0
  %157 = vmatprep.subr.mxu0 0.0
  %158 = vmatpush1.msra.mxu0 0.0
  %159 = vmatprep.subr.mxu0 0.0
  %160 = vmatpush1.msra.mxu0 0.0
  %161 = vmatprep.subr.mxu0 0.0
  %162 = vmatpush1.msra.mxu0 0.0
  %163 = vmatprep.subr.mxu0 0.0
  %164 = vmatpush1.msra.mxu0 0.0
  %165 = vmatprep.subr.mxu0 0.0
  %166 = vmatpush1.msra.mxu0 0.0
  %167 = vmatprep.subr.mxu0 0.0
  %168 = vmatpush1.msra.mxu0 0.0
  %169 = vmatprep.subr.mxu0 0.0
  %170 = vmatpush1.msra.mxu0 0.0
  %171 = vmatprep.subr.mxu0 0.0
  %172 = vmatpush1.msra.mxu0 0.0
  %173 = vmatprep.subr.mxu0 0.0
  %174 = vmatpush1.msra.mxu0 0.0
  %175 = vmatprep.subr.mxu0 0.0
  %176 = vmatpush1.msra.mxu0 0.0
  %177 = vmatprep.subr.mxu0 0.0
  %178 = vmatpush1.msra.mxu0 0.0
  %179 = vmatprep.subr.mxu0 0.0
  %180 = vmatpush1.msra.mxu0 0.0
  %181 = vmatprep.subr.mxu0 0.0
  %182 = vmatpush1.msra.mxu0 0.0
  %183 = vmatprep.subr.mxu0 0.0
  %184 = vmatpush1.msra.mxu0 0.0
  %185 = vmatprep.mubr.f32.mxu0 0.0
  %186 = vmatmul.mubr.f32.gmra.mrb[0].mxu0 %v40
  %v187 = vpop.f32.mrb[0].mxu0
  %v188 = vadd.f32 %v119, %v187
  %v189 = vpop.f32.mrb[0].mxu0
  %190 = vdwg.mxu0
  %v191 = vtanh.pop %v188
  %192 = vst [vmem:[%s6] sm:$0xff] %v191
  // Predicated region
  $region22: #{lora_predictor_forward.1} parent=0 // pred_check
    _
  $region23: #{lora_predictor_forward.1} parent=0 // pred_check_branch
    %194 = sbr.rel (0) target = $region25
  $region24: #{lora_predictor_forward.1} parent=0 // pred_region
    _
  $region25: #{lora_predictor_forward.1} parent=0 // pred_fallthru
    _
  // Predicated region
  $region26: #{lora_predictor_forward.1} parent=0 // pred_check
    _
  $region27: #{lora_predictor_forward.1} parent=0 // pred_check_branch
    %196 = sbr.rel (0) target = $region29
  $region28: #{lora_predictor_forward.1} parent=0 // pred_region
    _
  $region29: #{lora_predictor_forward.1} parent=0 // pred_fallthru
    _
  // Predicated region
  $region30: #{lora_predictor_forward.1} parent=0 // pred_check
    _
  $region31: #{lora_predictor_forward.1} parent=0 // pred_check_branch
    %198 = sbr.rel (0) target = $region33
  $region32: #{lora_predictor_forward.1} parent=0 // pred_region
    _
  $region33: #{lora_predictor_forward.1} parent=0 // pred_fallthru
    _
  // Predicated region
  $region34: #{lora_predictor_forward.1} parent=0 // pred_check
    _
  $region35: #{lora_predictor_forward.1} parent=0 // pred_check_branch
    %200 = sbr.rel (0) target = $region37
  $region36: #{lora_predictor_forward.1} parent=0 // pred_region
    _
  $region37: #{lora_predictor_forward.1} parent=0 // pred_fallthru
    _

</llo_original>
